<compile_context>
chip_gen: v5e
topology: v5e:2x2
jax: 0.10.0
libtpu: 0.0.40
codegen_flags: <defaults>
</compile_context>

<pallas_src>
import functools

import jax
import jax.numpy as jnp
from jax.experimental import pallas as pl
from jax.experimental.pallas import tpu as pltpu

SIGMA = 0.1
_COLS = 512           # lane-dense last dim (multiple of 128)
_ROW_TILE = 256       # 256 x 512 f32 tile = 512 KiB


# ----------------------------------------------------------------------------
# Counter-based PRNG (Threefry-2x32, 20 rounds) using only uint32 add/xor/shift.
# ----------------------------------------------------------------------------
def _threefry2x32(k0, k1, x0, x1):
    def rotl(v, r):
        return (v << jnp.uint32(r)) | (v >> jnp.uint32(32 - r))

    ks0 = k0
    ks1 = k1
    ks2 = jnp.uint32(0x1BD11BDA) ^ k0 ^ k1
    ks = (ks0, ks1, ks2)

    x0 = x0 + ks0
    x1 = x1 + ks1
    rotations = ((13, 15, 26, 6), (17, 29, 16, 24))
    for block in range(5):                       # 5 * 4 = 20 rounds, unrolled at trace time
        for r in rotations[block % 2]:
            x0 = x0 + x1
            x1 = rotl(x1, r)
            x1 = x1 ^ x0
        x0 = x0 + ks[(block + 1) % 3]
        x1 = x1 + ks[(block + 2) % 3] + jnp.uint32(block + 1)
    return x0, x1


# ----------------------------------------------------------------------------
# Pass 1: fused single-pass sum / sum-of-squares reduction (std of x).
# ----------------------------------------------------------------------------
def _stats_kernel(x_ref, sum_ref, sumsq_ref):
    @pl.when(pl.program_id(0) == 0)
    def _init():
        sum_ref[...] = jnp.zeros_like(sum_ref)
        sumsq_ref[...] = jnp.zeros_like(sumsq_ref)

    xt = x_ref[...].astype(jnp.float32)          # upcast only on the VMEM tile
    sum_ref[...] += jnp.sum(xt, keepdims=True)
    sumsq_ref[...] += jnp.sum(xt * xt, keepdims=True)


# ----------------------------------------------------------------------------
# Pass 2: per-tile Gaussian noise generation + add (native output dtype).
# ----------------------------------------------------------------------------
def _noise_kernel(seed_ref, scale_ref, x_ref, o_ref):
    rows_t, cols_t = x_ref.shape                 # static block shape
    half = cols_t // 2

    x = x_ref[...].astype(jnp.float32)
    scale = scale_ref[0]
    seed = seed_ref[0].astype(jnp.uint32)

    # Globally-unique counters per element -> independent noise regardless of
    # how the grid is tiled or sharded across TensorCores.
    row0 = pl.program_id(0) * rows_t
    rids = jax.lax.broadcasted_iota(jnp.int32, (rows_t, half), 0) + row0
    cids = jax.lax.broadcasted_iota(jnp.int32, (rows_t, half), 1)
    flat = rids * cols_t + cids
    c0 = flat.astype(jnp.uint32)
    c1 = (flat + half).astype(jnp.uint32)

    o0, o1 = _threefry2x32(seed, jnp.uint32(0x243F6A88), c0, c1)

    # 24-bit uniforms in [0, 1)
    inv24 = jnp.float32(1.0 / 16777216.0)
    u1 = (o0 >> jnp.uint32(8)).astype(jnp.int32).astype(jnp.float32) * inv24
    u2 = (o1 >> jnp.uint32(8)).astype(jnp.int32).astype(jnp.float32) * inv24

    # Box-Muller, using BOTH branches: two normals per (u1, u2) pair.
    r = jnp.sqrt(-2.0 * jnp.log(1.0 - u1))       # 1 - u1 in (0, 1] -> finite
    theta = (2.0 * jnp.pi) * u2
    z0 = r * jnp.cos(theta)
    z1 = r * jnp.sin(theta)
    noise = jnp.concatenate([z0, z1], axis=1)    # (rows_t, cols_t), lane-aligned halves

    o_ref[...] = (x + noise * scale).astype(o_ref.dtype)


# ----------------------------------------------------------------------------
# Wrapper: layout, std finalize, identity fast-paths.
# ----------------------------------------------------------------------------
@functools.partial(jax.jit, static_argnames=("sigma", "training", "is_relative_detach"))
def gaussian_noise(x, seed, *, sigma=SIGMA, training=True, is_relative_detach=True):
    """Pallas implementation of GaussianNoise.forward."""
    if (not training) or sigma == 0.0:
        return x                                  # PyTorch eval / sigma == 0 path

    orig_shape = x.shape
    n = x.size

    # Lane-dense padded slab: (padded_rows, 512); zero padding is harmless for
    # sum / sum-of-squares and the padded tail is sliced off at the end.
    cols = _COLS
    rows = -(-n // cols)
    row_tile = _ROW_TILE if rows >= _ROW_TILE else ((rows + 7) // 8) * 8
    padded_rows = -(-rows // row_tile) * row_tile
    total = padded_rows * cols

    xf = jnp.ravel(x)
    if total != n:
        xf = jnp.pad(xf, (0, total - n))
    x2 = xf.reshape(padded_rows, cols)           # native dtype, no wrapper-side casts
    grid = (padded_rows // row_tile,)

    # ---- pass 1: sum(x), sum(x*x) in one streaming read -------------------
    s, sq = pl.pallas_call(
        _stats_kernel,
        out_shape=(jax.ShapeDtypeStruct((1, 1), jnp.float32),
                   jax.ShapeDtypeStruct((1, 1), jnp.float32)),
        grid=grid,
        in_specs=[pl.BlockSpec((row_tile, cols), lambda i: (i, 0))],
        out_specs=(pl.BlockSpec((1, 1), lambda i: (0, 0)),
                   pl.BlockSpec((1, 1), lambda i: (0, 0))),
        compiler_params=pltpu.CompilerParams(dimension_semantics=("arbitrary",)),
    )(x2)

    # Finalize unbiased std (torch.Tensor.std default).  max(var, 0) guards the
    # catastrophic-cancellation corner of the fused sumsq - n*mean^2 formula.
    mean = s[0, 0] / n
    var = (sq[0, 0] - n * mean * mean) / max(n - 1, 1)
    std = jnp.sqrt(jnp.maximum(var, 0.0))
    scale = sigma * std
    if is_relative_detach:
        scale = jax.lax.stop_gradient(scale)

    seed_arr = jnp.asarray(seed, jnp.int32).reshape(1)
    scale_arr = jnp.asarray(scale, jnp.float32).reshape(1)

    # ---- pass 2: tile-parallel noise add (megacore-parallel axis) ---------
    out2 = pl.pallas_call(
        _noise_kernel,
        out_shape=jax.ShapeDtypeStruct((padded_rows, cols), x.dtype),
        grid=grid,
        in_specs=[pl.BlockSpec(memory_space=pltpu.MemorySpace.SMEM),   # seed
                  pl.BlockSpec(memory_space=pltpu.MemorySpace.SMEM),   # scale
                  pl.BlockSpec((row_tile, cols), lambda i: (i, 0))],   # x tile
        out_specs=pl.BlockSpec((row_tile, cols), lambda i: (i, 0)),
        compiler_params=pltpu.CompilerParams(dimension_semantics=("parallel",)),
    )(seed_arr, scale_arr, x2)

    return out2.reshape(-1)[:n].reshape(orig_shape)


if __name__ == "__main__":
    key = jax.random.PRNGKey(0)
    # small activation tensor consistent with the module
    x = jax.random.normal(key, (2, 4, 16, 16), jnp.float32) * 3.0 + 1.5

    out = jax.block_until_ready(gaussian_noise(x, 1234, sigma=SIGMA, training=True))
    assert out.shape == x.shape, out.shape

    # eval path is the identity (self.training == False)
    out_eval = jax.block_until_ready(gaussian_noise(x, 1234, training=False))
    assert jnp.array_equal(out_eval, x)

    # sigma == 0 path is the identity
    out_zero = jax.block_until_ready(gaussian_noise(x, 1234, sigma=0.0, training=True))
    assert jnp.array_equal(out_zero, x)

    # deterministic for a fixed seed
    out_again = jax.block_until_ready(gaussian_noise(x, 1234, sigma=SIGMA, training=True))
    assert jnp.array_equal(out, out_again)

    # different seed -> different noise
    out_other = jax.block_until_ready(gaussian_noise(x, 4321, sigma=SIGMA, training=True))
    assert not jnp.array_equal(out, out_other)

    # noise statistics: zero-mean, std == sigma * std(x) (unbiased, like torch)
    noise = out - x
    expected_scale = SIGMA * jnp.std(x, ddof=1)
    assert jnp.abs(jnp.mean(noise)) < 0.25 * expected_scale, float(jnp.mean(noise))
    assert jnp.abs(jnp.std(noise) / expected_scale - 1.0) < 0.15, float(jnp.std(noise))

    print("KERNEL_OK")
</pallas_src>

<mosaic_0001>
module attributes {stable_mosaic.version = 11 : i64} {
  func.func @_noise_kernel(%arg0: i32, %arg1: memref<1xi32, #tpu.memory_space<smem>>, %arg2: memref<1xf32, #tpu.memory_space<smem>>, %arg3: memref<8x512xf32, #tpu.memory_space<vmem>>, %arg4: memref<8x512xf32, #tpu.memory_space<vmem>>) attributes {dimension_semantics = [#tpu.dimension_semantics<parallel>], iteration_bounds = array<i64: 1>, scalar_prefetch = 0 : i64, scratch_operands = 0 : i64, tpu.core_type = #tpu.core_type<tc>, window_params = [{transform_indices = @transform_0, window_bounds = array<i64: 1>}, {transform_indices = @transform_1, window_bounds = array<i64: 1>}, {transform_indices = @transform_2, window_bounds = array<i64: 8, 512>}, {transform_indices = @transform_3, window_bounds = array<i64: 8, 512>}]} {
    %c0 = arith.constant 0 : index
    %c0_0 = arith.constant 0 : index
    %0 = vector.load %arg3[%c0, %c0_0] : memref<8x512xf32, #tpu.memory_space<vmem>>, vector<8x512xf32>
    %c0_1 = arith.constant 0 : index
    %1 = memref.load %arg2[%c0_1] : memref<1xf32, #tpu.memory_space<smem>>
    %c0_2 = arith.constant 0 : index
    %2 = memref.load %arg1[%c0_2] : memref<1xi32, #tpu.memory_space<smem>>
    %c8_i32 = arith.constant 8 : i32
    %3 = arith.muli %arg0, %c8_i32 : i32
    %4 = tpu.iota {dimensions = array<i32: 0>} : vector<8x256xi32>
    %5 = vector.broadcast %3 : i32 to vector<8x256xi32>
    %6 = arith.addi %4, %5 : vector<8x256xi32>
    %7 = tpu.iota {dimensions = array<i32: 1>} : vector<8x256xi32>
    %c512_i32 = arith.constant 512 : i32
    %8 = vector.broadcast %c512_i32 : i32 to vector<8x256xi32>
    %9 = arith.muli %6, %8 : vector<8x256xi32>
    %10 = arith.addi %9, %7 : vector<8x256xi32>
    %c256_i32 = arith.constant 256 : i32
    %11 = vector.broadcast %c256_i32 : i32 to vector<8x256xi32>
    %12 = arith.addi %10, %11 : vector<8x256xi32>
    %c466688986_i32 = arith.constant 466688986 : i32
    %13 = arith.xori %c466688986_i32, %2 : i32
    %c608135816_i32 = arith.constant 608135816 : i32
    %14 = arith.xori %13, %c608135816_i32 : i32
    %15 = vector.broadcast %2 : i32 to vector<8x256xi32>
    %16 = arith.addi %10, %15 : vector<8x256xi32>
    %c608135816_i32_3 = arith.constant 608135816 : i32
    %17 = vector.broadcast %c608135816_i32_3 : i32 to vector<8x256xi32>
    %18 = arith.addi %12, %17 : vector<8x256xi32>
    %19 = arith.addi %16, %18 : vector<8x256xi32>
    %c13_i32 = arith.constant 13 : i32
    %20 = vector.broadcast %c13_i32 : i32 to vector<8x256xi32>
    %21 = arith.shli %18, %20 : vector<8x256xi32>
    %c19_i32 = arith.constant 19 : i32
    %22 = vector.broadcast %c19_i32 : i32 to vector<8x256xi32>
    %23 = arith.shrui %18, %22 : vector<8x256xi32>
    %24 = arith.ori %21, %23 : vector<8x256xi32>
    %25 = arith.xori %24, %19 : vector<8x256xi32>
    %26 = arith.addi %19, %25 : vector<8x256xi32>
    %c15_i32 = arith.constant 15 : i32
    %27 = vector.broadcast %c15_i32 : i32 to vector<8x256xi32>
    %28 = arith.shli %25, %27 : vector<8x256xi32>
    %c17_i32 = arith.constant 17 : i32
    %29 = vector.broadcast %c17_i32 : i32 to vector<8x256xi32>
    %30 = arith.shrui %25, %29 : vector<8x256xi32>
    %31 = arith.ori %28, %30 : vector<8x256xi32>
    %32 = arith.xori %31, %26 : vector<8x256xi32>
    %33 = arith.addi %26, %32 : vector<8x256xi32>
    %c26_i32 = arith.constant 26 : i32
    %34 = vector.broadcast %c26_i32 : i32 to vector<8x256xi32>
    %35 = arith.shli %32, %34 : vector<8x256xi32>
    %c6_i32 = arith.constant 6 : i32
    %36 = vector.broadcast %c6_i32 : i32 to vector<8x256xi32>
    %37 = arith.shrui %32, %36 : vector<8x256xi32>
    %38 = arith.ori %35, %37 : vector<8x256xi32>
    %39 = arith.xori %38, %33 : vector<8x256xi32>
    %40 = arith.addi %33, %39 : vector<8x256xi32>
    %c6_i32_4 = arith.constant 6 : i32
    %41 = vector.broadcast %c6_i32_4 : i32 to vector<8x256xi32>
    %42 = arith.shli %39, %41 : vector<8x256xi32>
    %c26_i32_5 = arith.constant 26 : i32
    %43 = vector.broadcast %c26_i32_5 : i32 to vector<8x256xi32>
    %44 = arith.shrui %39, %43 : vector<8x256xi32>
    %45 = arith.ori %42, %44 : vector<8x256xi32>
    %46 = arith.xori %45, %40 : vector<8x256xi32>
    %c608135816_i32_6 = arith.constant 608135816 : i32
    %47 = vector.broadcast %c608135816_i32_6 : i32 to vector<8x256xi32>
    %48 = arith.addi %40, %47 : vector<8x256xi32>
    %49 = vector.broadcast %14 : i32 to vector<8x256xi32>
    %50 = arith.addi %46, %49 : vector<8x256xi32>
    %c1_i32 = arith.constant 1 : i32
    %51 = vector.broadcast %c1_i32 : i32 to vector<8x256xi32>
    %52 = arith.addi %50, %51 : vector<8x256xi32>
    %53 = arith.addi %48, %52 : vector<8x256xi32>
    %c17_i32_7 = arith.constant 17 : i32
    %54 = vector.broadcast %c17_i32_7 : i32 to vector<8x256xi32>
    %55 = arith.shli %52, %54 : vector<8x256xi32>
    %c15_i32_8 = arith.constant 15 : i32
    %56 = vector.broadcast %c15_i32_8 : i32 to vector<8x256xi32>
    %57 = arith.shrui %52, %56 : vector<8x256xi32>
    %58 = arith.ori %55, %57 : vector<8x256xi32>
    %59 = arith.xori %58, %53 : vector<8x256xi32>
    %60 = arith.addi %53, %59 : vector<8x256xi32>
    %c29_i32 = arith.constant 29 : i32
    %61 = vector.broadcast %c29_i32 : i32 to vector<8x256xi32>
    %62 = arith.shli %59, %61 : vector<8x256xi32>
    %c3_i32 = arith.constant 3 : i32
    %63 = vector.broadcast %c3_i32 : i32 to vector<8x256xi32>
    %64 = arith.shrui %59, %63 : vector<8x256xi32>
    %65 = arith.ori %62, %64 : vector<8x256xi32>
    %66 = arith.xori %65, %60 : vector<8x256xi32>
    %67 = arith.addi %60, %66 : vector<8x256xi32>
    %c16_i32 = arith.constant 16 : i32
    %68 = vector.broadcast %c16_i32 : i32 to vector<8x256xi32>
    %69 = arith.shli %66, %68 : vector<8x256xi32>
    %c16_i32_9 = arith.constant 16 : i32
    %70 = vector.broadcast %c16_i32_9 : i32 to vector<8x256xi32>
    %71 = arith.shrui %66, %70 : vector<8x256xi32>
    %72 = arith.ori %69, %71 : vector<8x256xi32>
    %73 = arith.xori %72, %67 : vector<8x256xi32>
    %74 = arith.addi %67, %73 : vector<8x256xi32>
    %c24_i32 = arith.constant 24 : i32
    %75 = vector.broadcast %c24_i32 : i32 to vector<8x256xi32>
    %76 = arith.shli %73, %75 : vector<8x256xi32>
    %c8_i32_10 = arith.constant 8 : i32
    %77 = vector.broadcast %c8_i32_10 : i32 to vector<8x256xi32>
    %78 = arith.shrui %73, %77 : vector<8x256xi32>
    %79 = arith.ori %76, %78 : vector<8x256xi32>
    %80 = arith.xori %79, %74 : vector<8x256xi32>
    %81 = vector.broadcast %14 : i32 to vector<8x256xi32>
    %82 = arith.addi %74, %81 : vector<8x256xi32>
    %83 = vector.broadcast %2 : i32 to vector<8x256xi32>
    %84 = arith.addi %80, %83 : vector<8x256xi32>
    %c2_i32 = arith.constant 2 : i32
    %85 = vector.broadcast %c2_i32 : i32 to vector<8x256xi32>
    %86 = arith.addi %84, %85 : vector<8x256xi32>
    %87 = arith.addi %82, %86 : vector<8x256xi32>
    %c13_i32_11 = arith.constant 13 : i32
    %88 = vector.broadcast %c13_i32_11 : i32 to vector<8x256xi32>
    %89 = arith.shli %86, %88 : vector<8x256xi32>
    %c19_i32_12 = arith.constant 19 : i32
    %90 = vector.broadcast %c19_i32_12 : i32 to vector<8x256xi32>
    %91 = arith.shrui %86, %90 : vector<8x256xi32>
    %92 = arith.ori %89, %91 : vector<8x256xi32>
    %93 = arith.xori %92, %87 : vector<8x256xi32>
    %94 = arith.addi %87, %93 : vector<8x256xi32>
    %c15_i32_13 = arith.constant 15 : i32
    %95 = vector.broadcast %c15_i32_13 : i32 to vector<8x256xi32>
    %96 = arith.shli %93, %95 : vector<8x256xi32>
    %c17_i32_14 = arith.constant 17 : i32
    %97 = vector.broadcast %c17_i32_14 : i32 to vector<8x256xi32>
    %98 = arith.shrui %93, %97 : vector<8x256xi32>
    %99 = arith.ori %96, %98 : vector<8x256xi32>
    %100 = arith.xori %99, %94 : vector<8x256xi32>
    %101 = arith.addi %94, %100 : vector<8x256xi32>
    %c26_i32_15 = arith.constant 26 : i32
    %102 = vector.broadcast %c26_i32_15 : i32 to vector<8x256xi32>
    %103 = arith.shli %100, %102 : vector<8x256xi32>
    %c6_i32_16 = arith.constant 6 : i32
    %104 = vector.broadcast %c6_i32_16 : i32 to vector<8x256xi32>
    %105 = arith.shrui %100, %104 : vector<8x256xi32>
    %106 = arith.ori %103, %105 : vector<8x256xi32>
    %107 = arith.xori %106, %101 : vector<8x256xi32>
    %108 = arith.addi %101, %107 : vector<8x256xi32>
    %c6_i32_17 = arith.constant 6 : i32
    %109 = vector.broadcast %c6_i32_17 : i32 to vector<8x256xi32>
    %110 = arith.shli %107, %109 : vector<8x256xi32>
    %c26_i32_18 = arith.constant 26 : i32
    %111 = vector.broadcast %c26_i32_18 : i32 to vector<8x256xi32>
    %112 = arith.shrui %107, %111 : vector<8x256xi32>
    %113 = arith.ori %110, %112 : vector<8x256xi32>
    %114 = arith.xori %113, %108 : vector<8x256xi32>
    %115 = vector.broadcast %2 : i32 to vector<8x256xi32>
    %116 = arith.addi %108, %115 : vector<8x256xi32>
    %c608135816_i32_19 = arith.constant 608135816 : i32
    %117 = vector.broadcast %c608135816_i32_19 : i32 to vector<8x256xi32>
    %118 = arith.addi %114, %117 : vector<8x256xi32>
    %c3_i32_20 = arith.constant 3 : i32
    %119 = vector.broadcast %c3_i32_20 : i32 to vector<8x256xi32>
    %120 = arith.addi %118, %119 : vector<8x256xi32>
    %121 = arith.addi %116, %120 : vector<8x256xi32>
    %c17_i32_21 = arith.constant 17 : i32
    %122 = vector.broadcast %c17_i32_21 : i32 to vector<8x256xi32>
    %123 = arith.shli %120, %122 : vector<8x256xi32>
    %c15_i32_22 = arith.constant 15 : i32
    %124 = vector.broadcast %c15_i32_22 : i32 to vector<8x256xi32>
    %125 = arith.shrui %120, %124 : vector<8x256xi32>
    %126 = arith.ori %123, %125 : vector<8x256xi32>
    %127 = arith.xori %126, %121 : vector<8x256xi32>
    %128 = arith.addi %121, %127 : vector<8x256xi32>
    %c29_i32_23 = arith.constant 29 : i32
    %129 = vector.broadcast %c29_i32_23 : i32 to vector<8x256xi32>
    %130 = arith.shli %127, %129 : vector<8x256xi32>
    %c3_i32_24 = arith.constant 3 : i32
    %131 = vector.broadcast %c3_i32_24 : i32 to vector<8x256xi32>
    %132 = arith.shrui %127, %131 : vector<8x256xi32>
    %133 = arith.ori %130, %132 : vector<8x256xi32>
    %134 = arith.xori %133, %128 : vector<8x256xi32>
    %135 = arith.addi %128, %134 : vector<8x256xi32>
    %c16_i32_25 = arith.constant 16 : i32
    %136 = vector.broadcast %c16_i32_25 : i32 to vector<8x256xi32>
    %137 = arith.shli %134, %136 : vector<8x256xi32>
    %c16_i32_26 = arith.constant 16 : i32
    %138 = vector.broadcast %c16_i32_26 : i32 to vector<8x256xi32>
    %139 = arith.shrui %134, %138 : vector<8x256xi32>
    %140 = arith.ori %137, %139 : vector<8x256xi32>
    %141 = arith.xori %140, %135 : vector<8x256xi32>
    %142 = arith.addi %135, %141 : vector<8x256xi32>
    %c24_i32_27 = arith.constant 24 : i32
    %143 = vector.broadcast %c24_i32_27 : i32 to vector<8x256xi32>
    %144 = arith.shli %141, %143 : vector<8x256xi32>
    %c8_i32_28 = arith.constant 8 : i32
    %145 = vector.broadcast %c8_i32_28 : i32 to vector<8x256xi32>
    %146 = arith.shrui %141, %145 : vector<8x256xi32>
    %147 = arith.ori %144, %146 : vector<8x256xi32>
    %148 = arith.xori %147, %142 : vector<8x256xi32>
    %c608135816_i32_29 = arith.constant 608135816 : i32
    %149 = vector.broadcast %c608135816_i32_29 : i32 to vector<8x256xi32>
    %150 = arith.addi %142, %149 : vector<8x256xi32>
    %151 = vector.broadcast %14 : i32 to vector<8x256xi32>
    %152 = arith.addi %148, %151 : vector<8x256xi32>
    %c4_i32 = arith.constant 4 : i32
    %153 = vector.broadcast %c4_i32 : i32 to vector<8x256xi32>
    %154 = arith.addi %152, %153 : vector<8x256xi32>
    %155 = arith.addi %150, %154 : vector<8x256xi32>
    %c13_i32_30 = arith.constant 13 : i32
    %156 = vector.broadcast %c13_i32_30 : i32 to vector<8x256xi32>
    %157 = arith.shli %154, %156 : vector<8x256xi32>
    %c19_i32_31 = arith.constant 19 : i32
    %158 = vector.broadcast %c19_i32_31 : i32 to vector<8x256xi32>
    %159 = arith.shrui %154, %158 : vector<8x256xi32>
    %160 = arith.ori %157, %159 : vector<8x256xi32>
    %161 = arith.xori %160, %155 : vector<8x256xi32>
    %162 = arith.addi %155, %161 : vector<8x256xi32>
    %c15_i32_32 = arith.constant 15 : i32
    %163 = vector.broadcast %c15_i32_32 : i32 to vector<8x256xi32>
    %164 = arith.shli %161, %163 : vector<8x256xi32>
    %c17_i32_33 = arith.constant 17 : i32
    %165 = vector.broadcast %c17_i32_33 : i32 to vector<8x256xi32>
    %166 = arith.shrui %161, %165 : vector<8x256xi32>
    %167 = arith.ori %164, %166 : vector<8x256xi32>
    %168 = arith.xori %167, %162 : vector<8x256xi32>
    %169 = arith.addi %162, %168 : vector<8x256xi32>
    %c26_i32_34 = arith.constant 26 : i32
    %170 = vector.broadcast %c26_i32_34 : i32 to vector<8x256xi32>
    %171 = arith.shli %168, %170 : vector<8x256xi32>
    %c6_i32_35 = arith.constant 6 : i32
    %172 = vector.broadcast %c6_i32_35 : i32 to vector<8x256xi32>
    %173 = arith.shrui %168, %172 : vector<8x256xi32>
    %174 = arith.ori %171, %173 : vector<8x256xi32>
    %175 = arith.xori %174, %169 : vector<8x256xi32>
    %176 = arith.addi %169, %175 : vector<8x256xi32>
    %c6_i32_36 = arith.constant 6 : i32
    %177 = vector.broadcast %c6_i32_36 : i32 to vector<8x256xi32>
    %178 = arith.shli %175, %177 : vector<8x256xi32>
    %c26_i32_37 = arith.constant 26 : i32
    %179 = vector.broadcast %c26_i32_37 : i32 to vector<8x256xi32>
    %180 = arith.shrui %175, %179 : vector<8x256xi32>
    %181 = arith.ori %178, %180 : vector<8x256xi32>
    %182 = arith.xori %181, %176 : vector<8x256xi32>
    %183 = vector.broadcast %14 : i32 to vector<8x256xi32>
    %184 = arith.addi %176, %183 : vector<8x256xi32>
    %185 = vector.broadcast %2 : i32 to vector<8x256xi32>
    %186 = arith.addi %182, %185 : vector<8x256xi32>
    %c5_i32 = arith.constant 5 : i32
    %187 = vector.broadcast %c5_i32 : i32 to vector<8x256xi32>
    %188 = arith.addi %186, %187 : vector<8x256xi32>
    %c8_i32_38 = arith.constant 8 : i32
    %189 = vector.broadcast %c8_i32_38 : i32 to vector<8x256xi32>
    %190 = arith.shrui %184, %189 : vector<8x256xi32>
    %191 = arith.sitofp %190 : vector<8x256xi32> to vector<8x256xf32>
    %cst = arith.constant 5.96046448E-8 : f32
    %192 = vector.broadcast %cst : f32 to vector<8x256xf32>
    %193 = arith.mulf %191, %192 : vector<8x256xf32>
    %c8_i32_39 = arith.constant 8 : i32
    %194 = vector.broadcast %c8_i32_39 : i32 to vector<8x256xi32>
    %195 = arith.shrui %188, %194 : vector<8x256xi32>
    %196 = arith.sitofp %195 : vector<8x256xi32> to vector<8x256xf32>
    %cst_40 = arith.constant 5.96046448E-8 : f32
    %197 = vector.broadcast %cst_40 : f32 to vector<8x256xf32>
    %198 = arith.mulf %196, %197 : vector<8x256xf32>
    %cst_41 = arith.constant 1.000000e+00 : f32
    %199 = vector.broadcast %cst_41 : f32 to vector<8x256xf32>
    %200 = arith.subf %199, %193 : vector<8x256xf32>
    %201 = math.log %200 : vector<8x256xf32>
    %cst_42 = arith.constant -2.000000e+00 : f32
    %202 = vector.broadcast %cst_42 : f32 to vector<8x256xf32>
    %203 = arith.mulf %202, %201 : vector<8x256xf32>
    %204 = math.sqrt %203 : vector<8x256xf32>
    %cst_43 = arith.constant 6.28318548 : f32
    %205 = vector.broadcast %cst_43 : f32 to vector<8x256xf32>
    %206 = arith.mulf %205, %198 : vector<8x256xf32>
    %207 = math.cos %206 : vector<8x256xf32>
    %208 = arith.mulf %204, %207 : vector<8x256xf32>
    %209 = math.sin %206 : vector<8x256xf32>
    %210 = arith.mulf %204, %209 : vector<8x256xf32>
    %211 = tpu.concatenate %208, %210 in 1 : vector<8x256xf32>, vector<8x256xf32> -> vector<8x512xf32>
    %212 = vector.broadcast %1 : f32 to vector<8x512xf32>
    %213 = arith.mulf %211, %212 : vector<8x512xf32>
    %214 = arith.addf %0, %213 : vector<8x512xf32>
    %c0_44 = arith.constant 0 : index
    %c0_45 = arith.constant 0 : index
    %215 = vector.load %arg4[%c0_44, %c0_45] : memref<8x512xf32, #tpu.memory_space<vmem>>, vector<8x512xf32>
    tpu.vector_store %arg4[%c0_44, %c0_45], %214 {strides = array<i32>} : memref<8x512xf32, #tpu.memory_space<vmem>>, vector<8x512xf32>,
    return
  }
  func.func @transform_0(%arg0: i32) -> i32 {
    %c0_i32 = arith.constant 0 : i32
    %c0_i32_0 = arith.constant 0 : i32
    return %c0_i32 : i32
  }
  func.func @transform_1(%arg0: i32) -> i32 {
    %c0_i32 = arith.constant 0 : i32
    %c0_i32_0 = arith.constant 0 : i32
    return %c0_i32 : i32
  }
  func.func @transform_2(%arg0: i32) -> (i32, i32) {
    %c0_i32 = arith.constant 0 : i32
    %c0_i32_0 = arith.constant 0 : i32
    return %arg0, %c0_i32 : i32, i32
  }
  func.func @transform_3(%arg0: i32) -> (i32, i32) {
    %c0_i32 = arith.constant 0 : i32
    %c0_i32_0 = arith.constant 0 : i32
    return %arg0, %c0_i32 : i32, i32
  }
}

module attributes {stable_mosaic.version = 11 : i64} {
  func.func @_stats_kernel(%arg0: i32, %arg1: memref<8x512xf32, #tpu.memory_space<vmem>>, %arg2: memref<1x1xf32, #tpu.memory_space<vmem>>, %arg3: memref<1x1xf32, #tpu.memory_space<vmem>>) attributes {dimension_semantics = [#tpu.dimension_semantics<arbitrary>], iteration_bounds = array<i64: 1>, scalar_prefetch = 0 : i64, scratch_operands = 0 : i64, tpu.core_type = #tpu.core_type<tc>, window_params = [{transform_indices = @transform_0, window_bounds = array<i64: 8, 512>}, {pipeline_mode = #tpu.pipeline_mode<synchronous>, transform_indices = @transform_1, window_bounds = array<i64: 1, 1>}, {pipeline_mode = #tpu.pipeline_mode<synchronous>, transform_indices = @transform_2, window_bounds = array<i64: 1, 1>}]} {
    %c0_i32 = arith.constant 0 : i32
    %0 = arith.cmpi eq, %arg0, %c0_i32 : i32
    %1 = arith.extui %0 : i1 to i32
    %c0_i32_0 = arith.constant 0 : i32
    %2 = arith.cmpi ne, %1, %c0_i32_0 : i32
    scf.if %2 {
      %cst_11 = arith.constant 0.000000e+00 : f32
      %21 = vector.broadcast %cst_11 : f32 to vector<1x1xf32>
      %c0_12 = arith.constant 0 : index
      %c0_13 = arith.constant 0 : index
      %22 = vector.load %arg2[%c0_12, %c0_13] : memref<1x1xf32, #tpu.memory_space<vmem>>, vector<1x1xf32>
      tpu.vector_store %arg2[%c0_12, %c0_13], %21 {strides = array<i32>} : memref<1x1xf32, #tpu.memory_space<vmem>>, vector<1x1xf32>,
      %cst_14 = arith.constant 0.000000e+00 : f32
      %23 = vector.broadcast %cst_14 : f32 to vector<1x1xf32>
      %c0_15 = arith.constant 0 : index
      %c0_16 = arith.constant 0 : index
      %24 = vector.load %arg3[%c0_15, %c0_16] : memref<1x1xf32, #tpu.memory_space<vmem>>, vector<1x1xf32>
      tpu.vector_store %arg3[%c0_15, %c0_16], %23 {strides = array<i32>} : memref<1x1xf32, #tpu.memory_space<vmem>>, vector<1x1xf32>,
    } else {
    }
    %c0 = arith.constant 0 : index
    %c0_1 = arith.constant 0 : index
    %3 = vector.load %arg1[%c0, %c0_1] : memref<8x512xf32, #tpu.memory_space<vmem>>, vector<8x512xf32>
    %c0_2 = arith.constant 0 : index
    %c0_3 = arith.constant 0 : index
    %4 = vector.load %arg2[%c0_2, %c0_3] : memref<1x1xf32, #tpu.memory_space<vmem>>, vector<1x1xf32>
    %5 = vector.shape_cast %3 : vector<8x512xf32> to vector<1x8x512xf32>
    %cst = arith.constant dense<0.000000e+00> : vector<1xf32>
    %6 = vector.multi_reduction <add>, %5, %cst [1, 2] : vector<1x8x512xf32> to vector<1xf32>
    %7 = vector.shape_cast %6 : vector<1xf32> to vector<1x1x1xf32>
    %8 = vector.extract %7[0, 0, 0] : f32 from vector<1x1x1xf32>
    %9 = vector.broadcast %8 : f32 to vector<1x1xf32>
    %10 = arith.addf %4, %9 : vector<1x1xf32>
    %c0_4 = arith.constant 0 : index
    %c0_5 = arith.constant 0 : index
    %11 = vector.load %arg2[%c0_4, %c0_5] : memref<1x1xf32, #tpu.memory_space<vmem>>, vector<1x1xf32>
    tpu.vector_store %arg2[%c0_4, %c0_5], %10 {strides = array<i32>} : memref<1x1xf32, #tpu.memory_space<vmem>>, vector<1x1xf32>,
    %c0_6 = arith.constant 0 : index
    %c0_7 = arith.constant 0 : index
    %12 = vector.load %arg3[%c0_6, %c0_7] : memref<1x1xf32, #tpu.memory_space<vmem>>, vector<1x1xf32>
    %13 = arith.mulf %3, %3 : vector<8x512xf32>
    %14 = vector.shape_cast %13 : vector<8x512xf32> to vector<1x8x512xf32>
    %cst_8 = arith.constant dense<0.000000e+00> : vector<1xf32>
    %15 = vector.multi_reduction <add>, %14, %cst_8 [1, 2] : vector<1x8x512xf32> to vector<1xf32>
    %16 = vector.shape_cast %15 : vector<1xf32> to vector<1x1x1xf32>
    %17 = vector.extract %16[0, 0, 0] : f32 from vector<1x1x1xf32>
    %18 = vector.broadcast %17 : f32 to vector<1x1xf32>
    %19 = arith.addf %12, %18 : vector<1x1xf32>
    %c0_9 = arith.constant 0 : index
    %c0_10 = arith.constant 0 : index
    %20 = vector.load %arg3[%c0_9, %c0_10] : memref<1x1xf32, #tpu.memory_space<vmem>>, vector<1x1xf32>
    tpu.vector_store %arg3[%c0_9, %c0_10], %19 {strides = array<i32>} : memref<1x1xf32, #tpu.memory_space<vmem>>, vector<1x1xf32>,
    return
  }
  func.func @transform_0(%arg0: i32) -> (i32, i32) {
    %c0_i32 = arith.constant 0 : i32
    %c0_i32_0 = arith.constant 0 : i32
    return %arg0, %c0_i32 : i32, i32
  }
  func.func @transform_1(%arg0: i32) -> (i32, i32) {
    %c0_i32 = arith.constant 0 : i32
    %c0_i32_0 = arith.constant 0 : i32
    %c0_i32_1 = arith.constant 0 : i32
    return %c0_i32, %c0_i32_0 : i32, i32
  }
  func.func @transform_2(%arg0: i32) -> (i32, i32) {
    %c0_i32 = arith.constant 0 : i32
    %c0_i32_0 = arith.constant 0 : i32
    %c0_i32_1 = arith.constant 0 : i32
    return %c0_i32, %c0_i32_0 : i32, i32
  }
}

</mosaic_0001>

<llo_original>
// kernel: gaussian_noise.2
$region0: #{gaussian_noise.2}
  #allocation0 [shape = 'u32[]', space=smem, size = 0x4, offset = 0x4, fixed_abs, tag = 'smem constant byte address 0x4 - core index']
  #allocation1 [shape = 'u32[72,128]{1,0:T(1,128)}', space=vmem, size = 0x9000, scoped, tag = 'internal scratch']
  %s0 = inlined_call_operand.vmem [shape: f32[8,512], index: 0, kind: input, shape index: {}]
  %s1 = inlined_call_operand.hbm [shape: f32[1,1], index: 1, kind: output, shape index: {0}]
  %s2 = inlined_call_operand.hbm [shape: f32[1,1], index: 2, kind: output, shape index: {1}]
  %3 = xla_tuple %s1, %s2
  %s4 = sld [smem:[#allocation0]]
  $region26: #{gaussian_noise.2} parent=0
    _
  %s6 = ssub.s32 1, %s4
  %s7 = scalar_select 0, %s6, %s4
  $region1: #{gaussian_noise.2} parent=0
    #allocation2 [shape = 'u8[512]{0}', space=vmem, size = 0x400, scoped, tag = 'output window, operand 0, single buffered']
    #allocation3 [shape = 's32[1]{0}', space=sflag, size = 0x4, scoped, tag = 'scoped memory for gaussian_noise.2']
    #allocation4 [shape = 'u8[512]{0}', space=vmem, size = 0x400, scoped, tag = 'output window, operand 1, single buffered']
    #allocation5 [shape = 's32[1]{0}', space=sflag, size = 0x4, scoped, tag = 'scoped memory for gaussian_noise.2']
    %8 = vsyncpa [#allocation3], 0
    %9 = vsyncpa [#allocation5], 0
    // Predicated region
    $region2: #{gaussian_noise.2} parent=1 // pred_check
      _
    $region3: #{gaussian_noise.2} parent=1 // pred_check_branch
      %11 = sbr.rel (0) target = $region5
    $region4: #{gaussian_noise.2} parent=1 // pred_region
      _
    $region5: #{gaussian_noise.2} parent=1 // pred_fallthru
      _
    %p12 = scmp.eq.s32.totalorder 0, 0
    // Predicated region
    $region6: #{gaussian_noise.2} parent=1 // pred_check
      %p13 = pneg %p12
    $region7: #{gaussian_noise.2} parent=1 // pred_check_branch
      %15 = sbr.rel (%p13) target = $region9
    $region8: #{gaussian_noise.2} parent=1 // pred_region
      %vm16 = vcmask 0
      %17 = vst.msk [vmem:[#allocation2] sm:$0x1] %vm16, 0.0
      %18 = vst.msk [vmem:[#allocation4] sm:$0x1] %vm16, 0.0
    $region9: #{gaussian_noise.2} parent=1 // pred_fallthru
      _
    %v19 = vld [vmem:[%s0] sm:$0xff]
    %v20 = vld [vmem:[%s0 + $0x8] sm:$0xff]
    %v21 = vld [vmem:[%s0 + $0x10] sm:$0xff]
    %v22 = vld [vmem:[%s0 + $0x18] sm:$0xff]
    %v23 = vld [vmem:[#allocation2] sm:$0x1]
    %v24 = vadd.f32 %v19, %v20
    %v25 = vadd.f32 %v24, %v21
    %v26 = vadd.f32 %v25, %v22
    %27 = vadd.xlane.f32.xlu0 %v26
    %v28 = vpop.xlane.xlu0 %27
    %v29 = vrot.slane %v28, 4
    %v30 = vadd.f32 %v28, %v29
    %v31 = vrot.slane %v30, 2
    %v32 = vadd.f32 %v30, %v31
    %v33 = vrot.slane %v32, 1
    %v34 = vadd.f32 %v32, %v33
    %s35 = vtos %v34
    %v36 = vstv %s35
    %v37 = vadd.f32 %v23, %v36
    %vm38 = vcmask 0
    %39 = vst.msk [vmem:[#allocation2] sm:$0x1] %vm38, %v37
    %v40 = vld [vmem:[#allocation4] sm:$0x1]
    %v41 = vmul.f32 %v19, %v19
    %v42 = vmul.f32 %v20, %v20
    %v43 = vmul.f32 %v21, %v21
    %v44 = vmul.f32 %v22, %v22
    %v45 = vadd.f32 %v41, %v42
    %v46 = vadd.f32 %v45, %v43
    %v47 = vadd.f32 %v46, %v44
    %48 = vadd.xlane.f32.xlu0 %v47
    %v49 = vpop.xlane.xlu0 %48
    %v50 = vrot.slane %v49, 4
    %v51 = vadd.f32 %v49, %v50
    %v52 = vrot.slane %v51, 2
    %v53 = vadd.f32 %v51, %v52
    %v54 = vrot.slane %v53, 1
    %v55 = vadd.f32 %v53, %v54
    %s56 = vtos %v55
    %v57 = vstv %s56
    %v58 = vadd.f32 %v40, %v57
    %59 = vst.msk [vmem:[#allocation4] sm:$0x1] %vm38, %v58
    // Predicated region
    $region10: #{gaussian_noise.2} parent=1 // pred_check
      _
    $region11: #{gaussian_noise.2} parent=1 // pred_check_branch
      %61 = sbr.rel (0) target = $region13
    $region12: #{gaussian_noise.2} parent=1 // pred_region
      %63 = vsyncadd [#allocation3], 0
      %s65 = sshll.u32 [#allocation2], 4
      %s66 = int_to_ptr.vmem [resolvable:$true] %s65
      %s67 = sshll.u32 %s1, 4
      %s68 = int_to_ptr.hbm [resolvable:$true] %s67
      %70 = dma.vmem_to_hbm [thread:$0]  %s66, 16, %s68, [#allocation3]
    $region13: #{gaussian_noise.2} parent=1 // pred_fallthru
      _
    // Predicated region
    $region14: #{gaussian_noise.2} parent=1 // pred_check
      _
    $region15: #{gaussian_noise.2} parent=1 // pred_check_branch
      %72 = sbr.rel (0) target = $region17
    $region16: #{gaussian_noise.2} parent=1 // pred_region
      %74 = vsyncadd [#allocation5], 0
      %s76 = sshll.u32 [#allocation4], 4
      %s77 = int_to_ptr.vmem [resolvable:$true] %s76
      %s78 = sshll.u32 %s2, 4
      %s79 = int_to_ptr.hbm [resolvable:$true] %s78
      %81 = dma.vmem_to_hbm [thread:$0]  %s77, 16, %s79, [#allocation5]
    $region17: #{gaussian_noise.2} parent=1 // pred_fallthru
      _
    // Predicated region
    $region18: #{gaussian_noise.2} parent=1 // pred_check
      _
    $region19: #{gaussian_noise.2} parent=1 // pred_check_branch
      %83 = sbr.rel (0) target = $region21
    $region20: #{gaussian_noise.2} parent=1 // pred_region
      %85 = dma.done [#allocation3], 16
    $region21: #{gaussian_noise.2} parent=1 // pred_fallthru
      _
    // Predicated region
    $region22: #{gaussian_noise.2} parent=1 // pred_check
      _
    $region23: #{gaussian_noise.2} parent=1 // pred_check_branch
      %87 = sbr.rel (0) target = $region25
    $region24: #{gaussian_noise.2} parent=1 // pred_region
      %89 = dma.done [#allocation5], 16
    $region25: #{gaussian_noise.2} parent=1 // pred_fallthru
      _
    %90 = vsyncpa [#allocation3], 1
    %91 = vsyncpa [#allocation5], 1

// kernel: gaussian_noise.3
$region0: #{gaussian_noise.3}
  #allocation0 [shape = 'u32[]', space=smem, size = 0x4, offset = 0x4, fixed_abs, tag = 'smem constant byte address 0x4 - core index']
  #allocation1 [shape = 'u32[72,128]{1,0:T(1,128)}', space=vmem, size = 0x9000, scoped, tag = 'internal scratch']
  #allocation2 [shape = 's32[1]{0:T(128)S(6)}', space=smem, size = 0x200, scoped, tag = 'scoped memory for gaussian_noise.3']
  #allocation3 [shape = 'f32[1]{0:T(128)S(6)}', space=smem, size = 0x200, scoped, tag = 'scoped memory for gaussian_noise.3']
  %s0 = inlined_call_operand.<no memory space> [shape: s32[1], index: 0, kind: input, shape index: {}]
  %s1 = inlined_call_operand.<no memory space> [shape: f32[1], index: 1, kind: input, shape index: {}]
  %s2 = inlined_call_operand.vmem [shape: f32[8,512], index: 2, kind: input, shape index: {}]
  %s3 = inlined_call_operand.vmem [shape: f32[8,512], index: 3, kind: output, shape index: {}]
  %s4 = sld [smem:[#allocation0]]
  $region22: #{gaussian_noise.3} parent=0
    _
  %s6 = ssub.s32 1, %s4
  %s7 = scalar_select 0, %s6, %s4
  %8 = sst [smem:[#allocation2]] %s0
  %9 = sst [smem:[#allocation3]] %s1
  // Predicated region
  $region2: #{gaussian_noise.3} parent=0 // pred_check
    _
  $region3: #{gaussian_noise.3} parent=0 // pred_check_branch
    %11 = sbr.rel (0) target = $region5
  $region4: #{gaussian_noise.3} parent=0 // pred_region
    _
  $region5: #{gaussian_noise.3} parent=0 // pred_fallthru
    _
  // Predicated region
  $region6: #{gaussian_noise.3} parent=0 // pred_check
    _
  $region7: #{gaussian_noise.3} parent=0 // pred_check_branch
    %13 = sbr.rel (0) target = $region9
  $region8: #{gaussian_noise.3} parent=0 // pred_region
    _
  $region9: #{gaussian_noise.3} parent=0 // pred_fallthru
    _
  // Predicated region
  $region10: #{gaussian_noise.3} parent=0 // pred_check
    _
  $region11: #{gaussian_noise.3} parent=0 // pred_check_branch
    %15 = sbr.rel (0) target = $region13
  $region12: #{gaussian_noise.3} parent=0 // pred_region
    _
  $region13: #{gaussian_noise.3} parent=0 // pred_fallthru
    _
  %v16 = vld [vmem:[%s2] sm:$0xff]
  %v17 = vld [vmem:[%s2 + $0x8] sm:$0xff]
  %v18 = vld [vmem:[%s2 + $0x10] sm:$0xff]
  %v19 = vld [vmem:[%s2 + $0x18] sm:$0xff]
  %s20 = sld [smem:[#allocation3]]
  %s21 = sld [smem:[#allocation2]]
  %s22 = smul.u32 0, 8
  %v23 = vlaneseq
  %v24 = vshrl.u32 %v23, 7
  %v25 = vstv %s22
  %v26 = vadd.s32 %v24, %v25
  %v27 = vlaneseq
  %v28 = vand.u32 %v27, 127
  %v29 = vadd.s32 %v28, 128
  %v30 = vmul.u32 %v26, 512
  %v31 = vadd.s32 %v30, %v28
  %v32 = vadd.s32 %v30, %v29
  %v33 = vadd.s32 %v31, 256
  %v34 = vadd.s32 %v32, 256
  %s35 = sxor.u32 %s21, 466688986
  %s36 = sxor.u32 %s35, 608135816
  %v37 = vstv %s21
  %v38 = vadd.s32 %v31, %v37
  %v39 = vadd.s32 %v32, %v37
  %v40 = vadd.s32 %v33, 608135816
  %v41 = vadd.s32 %v34, 608135816
  %v42 = vadd.s32 %v38, %v40
  %v43 = vadd.s32 %v39, %v41
  %v44 = vshll.u32 %v40, 13
  %v45 = vshll.u32 %v41, 13
  %v46 = vshrl.u32 %v40, 19
  %v47 = vshrl.u32 %v41, 19
  %v48 = vor.u32 %v44, %v46
  %v49 = vor.u32 %v45, %v47
  %v50 = vxor.u32 %v48, %v42
  %v51 = vxor.u32 %v49, %v43
  %v52 = vadd.s32 %v42, %v50
  %v53 = vadd.s32 %v43, %v51
  %v54 = vshll.u32 %v50, 15
  %v55 = vshll.u32 %v51, 15
  %v56 = vshrl.u32 %v50, 17
  %v57 = vshrl.u32 %v51, 17
  %v58 = vor.u32 %v54, %v56
  %v59 = vor.u32 %v55, %v57
  %v60 = vxor.u32 %v58, %v52
  %v61 = vxor.u32 %v59, %v53
  %v62 = vadd.s32 %v52, %v60
  %v63 = vadd.s32 %v53, %v61
  %v64 = vshll.u32 %v60, 26
  %v65 = vshll.u32 %v61, 26
  %v66 = vshrl.u32 %v60, 6
  %v67 = vshrl.u32 %v61, 6
  %v68 = vor.u32 %v64, %v66
  %v69 = vor.u32 %v65, %v67
  %v70 = vxor.u32 %v68, %v62
  %v71 = vxor.u32 %v69, %v63
  %v72 = vadd.s32 %v62, %v70
  %v73 = vadd.s32 %v63, %v71
  %v74 = vshll.u32 %v70, 6
  %v75 = vshll.u32 %v71, 6
  %v76 = vshrl.u32 %v70, 26
  %v77 = vshrl.u32 %v71, 26
  %v78 = vor.u32 %v74, %v76
  %v79 = vor.u32 %v75, %v77
  %v80 = vxor.u32 %v78, %v72
  %v81 = vxor.u32 %v79, %v73
  %v82 = vadd.s32 %v72, 608135816
  %v83 = vadd.s32 %v73, 608135816
  %v84 = vstv %s36
  %v85 = vadd.s32 %v80, %v84
  %v86 = vadd.s32 %v81, %v84
  %v87 = vadd.s32 %v85, 1
  %v88 = vadd.s32 %v86, 1
  %v89 = vadd.s32 %v82, %v87
  %v90 = vadd.s32 %v83, %v88
  %v91 = vshll.u32 %v87, 17
  %v92 = vshll.u32 %v88, 17
  %v93 = vshrl.u32 %v87, 15
  %v94 = vshrl.u32 %v88, 15
  %v95 = vor.u32 %v91, %v93
  %v96 = vor.u32 %v92, %v94
  %v97 = vxor.u32 %v95, %v89
  %v98 = vxor.u32 %v96, %v90
  %v99 = vadd.s32 %v89, %v97
  %v100 = vadd.s32 %v90, %v98
  %v101 = vshll.u32 %v97, 29
  %v102 = vshll.u32 %v98, 29
  %v103 = vshrl.u32 %v97, 3
  %v104 = vshrl.u32 %v98, 3
  %v105 = vor.u32 %v101, %v103
  %v106 = vor.u32 %v102, %v104
  %v107 = vxor.u32 %v105, %v99
  %v108 = vxor.u32 %v106, %v100
  %v109 = vadd.s32 %v99, %v107
  %v110 = vadd.s32 %v100, %v108
  %v111 = vshll.u32 %v107, 16
  %v112 = vshll.u32 %v108, 16
  %v113 = vshrl.u32 %v107, 16
  %v114 = vshrl.u32 %v108, 16
  %v115 = vor.u32 %v111, %v113
  %v116 = vor.u32 %v112, %v114
  %v117 = vxor.u32 %v115, %v109
  %v118 = vxor.u32 %v116, %v110
  %v119 = vadd.s32 %v109, %v117
  %v120 = vadd.s32 %v110, %v118
  %v121 = vshll.u32 %v117, 24
  %v122 = vshll.u32 %v118, 24
  %v123 = vshrl.u32 %v117, 8
  %v124 = vshrl.u32 %v118, 8
  %v125 = vor.u32 %v121, %v123
  %v126 = vor.u32 %v122, %v124
  %v127 = vxor.u32 %v125, %v119
  %v128 = vxor.u32 %v126, %v120
  %v129 = vadd.s32 %v119, %v84
  %v130 = vadd.s32 %v120, %v84
  %v131 = vadd.s32 %v127, %v37
  %v132 = vadd.s32 %v128, %v37
  %v133 = vadd.s32 %v131, 2
  %v134 = vadd.s32 %v132, 2
  %v135 = vadd.s32 %v129, %v133
  %v136 = vadd.s32 %v130, %v134
  %v137 = vshll.u32 %v133, 13
  %v138 = vshll.u32 %v134, 13
  %v139 = vshrl.u32 %v133, 19
  %v140 = vshrl.u32 %v134, 19
  %v141 = vor.u32 %v137, %v139
  %v142 = vor.u32 %v138, %v140
  %v143 = vxor.u32 %v141, %v135
  %v144 = vxor.u32 %v142, %v136
  %v145 = vadd.s32 %v135, %v143
  %v146 = vadd.s32 %v136, %v144
  %v147 = vshll.u32 %v143, 15
  %v148 = vshll.u32 %v144, 15
  %v149 = vshrl.u32 %v143, 17
  %v150 = vshrl.u32 %v144, 17
  %v151 = vor.u32 %v147, %v149
  %v152 = vor.u32 %v148, %v150
  %v153 = vxor.u32 %v151, %v145
  %v154 = vxor.u32 %v152, %v146
  %v155 = vadd.s32 %v145, %v153
  %v156 = vadd.s32 %v146, %v154
  %v157 = vshll.u32 %v153, 26
  %v158 = vshll.u32 %v154, 26
  %v159 = vshrl.u32 %v153, 6
  %v160 = vshrl.u32 %v154, 6
  %v161 = vor.u32 %v157, %v159
  %v162 = vor.u32 %v158, %v160
  %v163 = vxor.u32 %v161, %v155
  %v164 = vxor.u32 %v162, %v156
  %v165 = vadd.s32 %v155, %v163
  %v166 = vadd.s32 %v156, %v164
  %v167 = vshll.u32 %v163, 6
  %v168 = vshll.u32 %v164, 6
  %v169 = vshrl.u32 %v163, 26
  %v170 = vshrl.u32 %v164, 26
  %v171 = vor.u32 %v167, %v169
  %v172 = vor.u32 %v168, %v170
  %v173 = vxor.u32 %v171, %v165
  %v174 = vxor.u32 %v172, %v166
  %v175 = vadd.s32 %v165, %v37
  %v176 = vadd.s32 %v166, %v37
  %v177 = vadd.s32 %v173, 608135816
  %v178 = vadd.s32 %v174, 608135816
  %v179 = vadd.s32 %v177, 3
  %v180 = vadd.s32 %v178, 3
  %v181 = vadd.s32 %v175, %v179
  %v182 = vadd.s32 %v176, %v180
  %v183 = vshll.u32 %v179, 17
  %v184 = vshll.u32 %v180, 17
  %v185 = vshrl.u32 %v179, 15
  %v186 = vshrl.u32 %v180, 15
  %v187 = vor.u32 %v183, %v185
  %v188 = vor.u32 %v184, %v186
  %v189 = vxor.u32 %v187, %v181
  %v190 = vxor.u32 %v188, %v182
  %v191 = vadd.s32 %v181, %v189
  %v192 = vadd.s32 %v182, %v190
  %v193 = vshll.u32 %v189, 29
  %v194 = vshll.u32 %v190, 29
  %v195 = vshrl.u32 %v189, 3
  %v196 = vshrl.u32 %v190, 3
  %v197 = vor.u32 %v193, %v195
  %v198 = vor.u32 %v194, %v196
  %v199 = vxor.u32 %v197, %v191
  %v200 = vxor.u32 %v198, %v192
  %v201 = vadd.s32 %v191, %v199
  %v202 = vadd.s32 %v192, %v200
  %v203 = vshll.u32 %v199, 16
  %v204 = vshll.u32 %v200, 16
  %v205 = vshrl.u32 %v199, 16
  %v206 = vshrl.u32 %v200, 16
  %v207 = vor.u32 %v203, %v205
  %v208 = vor.u32 %v204, %v206
  %v209 = vxor.u32 %v207, %v201
  %v210 = vxor.u32 %v208, %v202
  %v211 = vadd.s32 %v201, %v209
  %v212 = vadd.s32 %v202, %v210
  %v213 = vshll.u32 %v209, 24
  %v214 = vshll.u32 %v210, 24
  %v215 = vshrl.u32 %v209, 8
  %v216 = vshrl.u32 %v210, 8
  %v217 = vor.u32 %v213, %v215
  %v218 = vor.u32 %v214, %v216
  %v219 = vxor.u32 %v217, %v211
  %v220 = vxor.u32 %v218, %v212
  %v221 = vadd.s32 %v211, 608135816
  %v222 = vadd.s32 %v212, 608135816
  %v223 = vadd.s32 %v219, %v84
  %v224 = vadd.s32 %v220, %v84
  %v225 = vadd.s32 %v223, 4
  %v226 = vadd.s32 %v224, 4
  %v227 = vadd.s32 %v221, %v225
  %v228 = vadd.s32 %v222, %v226
  %v229 = vshll.u32 %v225, 13
  %v230 = vshll.u32 %v226, 13
  %v231 = vshrl.u32 %v225, 19
  %v232 = vshrl.u32 %v226, 19
  %v233 = vor.u32 %v229, %v231
  %v234 = vor.u32 %v230, %v232
  %v235 = vxor.u32 %v233, %v227
  %v236 = vxor.u32 %v234, %v228
  %v237 = vadd.s32 %v227, %v235
  %v238 = vadd.s32 %v228, %v236
  %v239 = vshll.u32 %v235, 15
  %v240 = vshll.u32 %v236, 15
  %v241 = vshrl.u32 %v235, 17
  %v242 = vshrl.u32 %v236, 17
  %v243 = vor.u32 %v239, %v241
  %v244 = vor.u32 %v240, %v242
  %v245 = vxor.u32 %v243, %v237
  %v246 = vxor.u32 %v244, %v238
  %v247 = vadd.s32 %v237, %v245
  %v248 = vadd.s32 %v238, %v246
  %v249 = vshll.u32 %v245, 26
  %v250 = vshll.u32 %v246, 26
  %v251 = vshrl.u32 %v245, 6
  %v252 = vshrl.u32 %v246, 6
  %v253 = vor.u32 %v249, %v251
  %v254 = vor.u32 %v250, %v252
  %v255 = vxor.u32 %v253, %v247
  %v256 = vxor.u32 %v254, %v248
  %v257 = vadd.s32 %v247, %v255
  %v258 = vadd.s32 %v248, %v256
  %v259 = vshll.u32 %v255, 6
  %v260 = vshll.u32 %v256, 6
  %v261 = vshrl.u32 %v255, 26
  %v262 = vshrl.u32 %v256, 26
  %v263 = vor.u32 %v259, %v261
  %v264 = vor.u32 %v260, %v262
  %v265 = vxor.u32 %v263, %v257
  %v266 = vxor.u32 %v264, %v258
  %v267 = vadd.s32 %v257, %v84
  %v268 = vadd.s32 %v258, %v84
  %v269 = vadd.s32 %v265, %v37
  %v270 = vadd.s32 %v266, %v37
  %v271 = vadd.s32 %v269, 5
  %v272 = vadd.s32 %v270, 5
  %v273 = vshrl.u32 %v267, 8
  %v274 = vshrl.u32 %v268, 8
  %v275 = vcvt.s32.f32 %v273
  %v276 = vcvt.s32.f32 %v274
  %v277 = vmul.f32 %v275, 5.9604645e-08
  %v278 = vmul.f32 %v276, 5.9604645e-08
  %v279 = vshrl.u32 %v271, 8
  %v280 = vshrl.u32 %v272, 8
  %v281 = vcvt.s32.f32 %v279
  %v282 = vcvt.s32.f32 %v280
  %v283 = vmul.f32 %v281, 5.9604645e-08
  %v284 = vmul.f32 %v282, 5.9604645e-08
  %v285 = vsub.f32 1.0, %v277
  %v286 = vsub.f32 1.0, %v278
  %v287 = vlog2.pop %v285
  %v288 = vmul.f32 %v287, 0.6931472
  %v289 = vlog2.pop %v286
  %v290 = vmul.f32 %v289, 0.6931472
  %v291 = vmul.f32 %v288, -2.0
  %v292 = vmul.f32 %v290, -2.0
  %v293 = vrsqrt.pop %v291
  %v294 = vmul.f32 %v293, %v291
  %v295 = vmul.f32 %v294, %v293
  %v296 = vmul.f32 0.5, %v295
  %v297 = vsub.f32 1.5, %v296
  %v298 = vmul.f32 %v293, %v297
  %v299 = vmul.f32 %v291, %v298
  %vm300 = vcmp.eq.f32.partialorder %v291, inf
  %v301 = vsel %vm300, %v291, %v299
  %vm302 = vcmp.eq.f32.partialorder %v291, 0.0
  %v303 = vand.u32 %v291, 2147483648
  %v304 = vsel %vm302, %v303, %v301
  %v305 = vrsqrt.pop %v292
  %v306 = vmul.f32 %v305, %v292
  %v307 = vmul.f32 %v306, %v305
  %v308 = vmul.f32 0.5, %v307
  %v309 = vsub.f32 1.5, %v308
  %v310 = vmul.f32 %v305, %v309
  %v311 = vmul.f32 %v292, %v310
  %vm312 = vcmp.eq.f32.partialorder %v292, inf
  %v313 = vsel %vm312, %v292, %v311
  %vm314 = vcmp.eq.f32.partialorder %v292, 0.0
  %v315 = vand.u32 %v292, 2147483648
  %v316 = vsel %vm314, %v315, %v313
  %v317 = vmul.f32 %v283, 6.2831855
  %v318 = vmul.f32 %v284, 6.2831855
  %v319 = vand.u32 2147483647, %v317
  %vm320 = vcmp.le.f32.partialorder %v319, 0.7853982
  %vm321 = vcmp.lt.s32.totalorder %v317, 0
  %v322 = vand.u32 %v317, 2139095040
  %v323 = vshrl.u32 %v322, 23
  %v324 = vsub.s32 %v323, 127
  %v325 = vand.u32 2147483647, %v317
  %v326 = vand.u32 %v325, 8388607
  %v327 = vor.u32 %v326, 8388608
  %v328 = vsub.s32 0, %v327
  %v329 = vadd.s32 %v324, 1
  %vm330 = vcmp.gt.s32.totalorder %v329, 0
  %v331 = vsel %vm330, %v329, 0
  %v332 = vshrl.u32 %v331, 5
  %v333 = vand.u32 %v331, 31
  %v334 = vsub.s32 32, %v333
  %v335 = vshrl.u32 683565275, %v334
  %v336 = vshll.u32 683565275, %v333
  %v337 = vshrl.u32 2475754826, %v334
  %v338 = vor.u32 %v336, %v337
  %v339 = vshll.u32 2475754826, %v333
  %v340 = vshrl.u32 2131351028, %v334
  %v341 = vor.u32 %v339, %v340
  %v342 = vshll.u32 2131351028, %v333
  %v343 = vshrl.u32 2102212464, %v334
  %v344 = vor.u32 %v342, %v343
  %v345 = vshll.u32 2102212464, %v333
  %v346 = vshrl.u32 920167782, %v334
  %v347 = vor.u32 %v345, %v346
  %v348 = vshll.u32 920167782, %v333
  %v349 = vshrl.u32 1326507024, %v334
  %v350 = vor.u32 %v348, %v349
  %vm351 = vcmp.lt.s32.totalorder %v332, 1
  %vm352 = vcmp.lt.s32.totalorder %v332, 2
  %vm353 = vcmp.lt.s32.totalorder %v332, 3
  %vm354 = vcmp.lt.s32.totalorder %v332, 4
  %v355 = vsel %vm351, %v335, %v338
  %v356 = vsel %vm354, %v344, 2102212464
  %v357 = vsel %vm353, %v341, %v356
  %v358 = vsel %vm352, %v355, %v357
  %v359 = vsel %vm351, %v338, %v341
  %v360 = vsel %vm354, %v347, 920167782
  %v361 = vsel %vm353, %v344, %v360
  %v362 = vsel %vm352, %v359, %v361
  %v363 = vsel %vm351, %v341, %v344
  %v364 = vsel %vm354, %v350, 1326507024
  %v365 = vsel %vm353, %v347, %v364
  %v366 = vsel %vm352, %v363, %v365
  %v367 = vshll.u32 %v327, 8
  %v368 = vand.u32 %v367, 65535
  %v369 = vshrl.u32 %v367, 16
  %v370 = vand.u32 %v366, 65535
  %v371 = vshrl.u32 %v366, 16
  %v372 = vmul.u32 %v368, %v370
  %v373 = vmul.u32 %v368, %v371
  %v374 = vmul.u32 %v369, %v370
  %v375 = vmul.u32 %v369, %v371
  %v376 = vshll.u32 %v373, 16
  %v377 = vshrl.u32 %v373, 16
  %v378 = vshll.u32 %v374, 16
  %v379 = vshrl.u32 %v374, 16
  %vm380 = vc.u32 %v372, %v376
  %v381 = vsel %vm380, 1, 0
  %v382 = vadd.s32 %v372, %v376
  %v383 = vadd.s32 %v375, %v381
  %vm384 = vc.u32 %v382, %v378
  %v385 = vsel %vm384, 1, 0
  %v386 = vadd.s32 %v382, %v378
  %v387 = vadd.s32 %v383, %v385
  %v388 = vadd.s32 %v387, %v377
  %v389 = vadd.s32 %v388, %v379
  %v390 = vand.u32 %v367, 65535
  %v391 = vshrl.u32 %v367, 16
  %v392 = vand.u32 %v362, 65535
  %v393 = vshrl.u32 %v362, 16
  %v394 = vmul.u32 %v390, %v392
  %v395 = vmul.u32 %v390, %v393
  %v396 = vmul.u32 %v391, %v392
  %v397 = vmul.u32 %v391, %v393
  %v398 = vshll.u32 %v395, 16
  %v399 = vshrl.u32 %v395, 16
  %v400 = vshll.u32 %v396, 16
  %v401 = vshrl.u32 %v396, 16
  %vm402 = vc.u32 %v394, %v398
  %v403 = vsel %vm402, 1, 0
  %v404 = vadd.s32 %v394, %v398
  %v405 = vadd.s32 %v397, %v403
  %vm406 = vc.u32 %v404, %v400
  %v407 = vsel %vm406, 1, 0
  %v408 = vadd.s32 %v404, %v400
  %v409 = vadd.s32 %v405, %v407
  %v410 = vadd.s32 %v409, %v399
  %v411 = vadd.s32 %v410, %v401
  %v412 = vmul.u32 %v367, %v358
  %v413 = vadd.s32 %v389, %v408
  %vm414 = vc.u32 %v389, %v408
  %v415 = vadd.s32 %v411, 1
  %v416 = vsel %vm414, %v415, %v411
  %v417 = vadd.s32 %v412, %v416
  %v418 = vadd.s32 %v417, 536870912
  %v419 = vshrl.u32 %v418, 30
  %v420 = vshll.u32 %v419, 30
  %v421 = vsub.s32 %v417, %v420
  %vm422 = vcmp.lt.s32.totalorder %v421, 0
  %v423 = vsub.s32 0, %v421
  %v424 = vsel %vm422, %v423, %v421
  %v425 = vclz %v424
  %v426 = vsub.s32 %v425, 2
  %vm427 = vcmp.gt.s32.totalorder 0, %v426
  %v428 = vsel %vm427, 0, %v426
  %v429 = vsub.s32 32, %v428
  %v430 = vshll.u32 %v421, %v428
  %v431 = vshrl.u32 %v413, %v429
  %v432 = vor.u32 %v430, %v431
  %v433 = vsub.s32 4294967266, %v428
  %v434 = vadd.s32 %v433, 127
  %v435 = vshll.u32 %v434, 23
  %v436 = vor.u32 4788187, %v435
  %v437 = vand.u32 2147483647, %v436
  %v439 = vcvt.s32.f32 %v432
  %v440 = vmul.f32 %v439, %v437
  %v441 = vxor.u32 %v440, 2147483648
  %v442 = vsel %vm321, %v441, %v440
  %v443 = vsub.s32 4, %v419
  %v444 = vsel %vm321, %v443, %v419
  %v445 = vsel %vm320, %v317, %v442
  %v446 = vsel %vm320, 0, %v444
  %v447 = vmul.f32 %v445, %v445
  %v448 = vmul.f32 %v447, -0.001358992
  %v449 = vadd.f32 %v448, 0.041655596
  %v450 = vmul.f32 %v447, %v449
  %v451 = vadd.f32 %v450, -0.4999988
  %v452 = vmul.f32 %v447, %v451
  %v453 = vadd.f32 1.0, %v452
  %v454 = vmul.f32 %v445, %v445
  %v455 = vmul.f32 %v454, -0.00019511016
  %v456 = vadd.f32 %v455, 0.008332121
  %v457 = vmul.f32 %v454, %v456
  %v458 = vadd.f32 %v457, -0.16666654
  %v459 = vmul.f32 %v454, %v458
  %v460 = vadd.f32 %v459, 1.0
  %v461 = vmul.f32 %v460, %v445
  %vm462 = vweird.f32 %v317
  %v463 = vand.u32 %v446, 3
  %vm464 = vcmp.lt.s32.totalorder %v463, 2
  %vm465 = vcmp.eq.s32.totalorder %v463, 0
  %v466 = vxor.u32 %v461, 2147483648
  %v467 = vsel %vm465, %v453, %v466
  %vm468 = vcmp.eq.s32.totalorder %v463, 2
  %v469 = vxor.u32 %v453, 2147483648
  %v470 = vsel %vm468, %v469, %v461
  %v471 = vsel %vm464, %v467, %v470
  %v472 = vsel %vm462, nan, %v471
  %v473 = vand.u32 2147483647, %v318
  %vm474 = vcmp.le.f32.partialorder %v473, 0.7853982
  %vm475 = vcmp.lt.s32.totalorder %v318, 0
  %v476 = vand.u32 %v318, 2139095040
  %v477 = vshrl.u32 %v476, 23
  %v478 = vsub.s32 %v477, 127
  %v479 = vand.u32 2147483647, %v318
  %v480 = vand.u32 %v479, 8388607
  %v481 = vor.u32 %v480, 8388608
  %v482 = vsub.s32 0, %v481
  %v483 = vadd.s32 %v478, 1
  %vm484 = vcmp.gt.s32.totalorder %v483, 0
  %v485 = vsel %vm484, %v483, 0
  %v486 = vshrl.u32 %v485, 5
  %v487 = vand.u32 %v485, 31
  %v488 = vsub.s32 32, %v487
  %v489 = vshrl.u32 683565275, %v488
  %v490 = vshll.u32 683565275, %v487
  %v491 = vshrl.u32 2475754826, %v488
  %v492 = vor.u32 %v490, %v491
  %v493 = vshll.u32 2475754826, %v487
  %v494 = vshrl.u32 2131351028, %v488
  %v495 = vor.u32 %v493, %v494
  %v496 = vshll.u32 2131351028, %v487
  %v497 = vshrl.u32 2102212464, %v488
  %v498 = vor.u32 %v496, %v497
  %v499 = vshll.u32 2102212464, %v487
  %v500 = vshrl.u32 920167782, %v488
  %v501 = vor.u32 %v499, %v500
  %v502 = vshll.u32 920167782, %v487
  %v503 = vshrl.u32 1326507024, %v488
  %v504 = vor.u32 %v502, %v503
  %vm505 = vcmp.lt.s32.totalorder %v486, 1
  %vm506 = vcmp.lt.s32.totalorder %v486, 2
  %vm507 = vcmp.lt.s32.totalorder %v486, 3
  %vm508 = vcmp.lt.s32.totalorder %v486, 4
  %v509 = vsel %vm505, %v489, %v492
  %v510 = vsel %vm508, %v498, 2102212464
  %v511 = vsel %vm507, %v495, %v510
  %v512 = vsel %vm506, %v509, %v511
  %v513 = vsel %vm505, %v492, %v495
  %v514 = vsel %vm508, %v501, 920167782
  %v515 = vsel %vm507, %v498, %v514
  %v516 = vsel %vm506, %v513, %v515
  %v517 = vsel %vm505, %v495, %v498
  %v518 = vsel %vm508, %v504, 1326507024
  %v519 = vsel %vm507, %v501, %v518
  %v520 = vsel %vm506, %v517, %v519
  %v521 = vshll.u32 %v481, 8
  %v522 = vand.u32 %v521, 65535
  %v523 = vshrl.u32 %v521, 16
  %v524 = vand.u32 %v520, 65535
  %v525 = vshrl.u32 %v520, 16
  %v526 = vmul.u32 %v522, %v524
  %v527 = vmul.u32 %v522, %v525
  %v528 = vmul.u32 %v523, %v524
  %v529 = vmul.u32 %v523, %v525
  %v530 = vshll.u32 %v527, 16
  %v531 = vshrl.u32 %v527, 16
  %v532 = vshll.u32 %v528, 16
  %v533 = vshrl.u32 %v528, 16
  %vm534 = vc.u32 %v526, %v530
  %v535 = vsel %vm534, 1, 0
  %v536 = vadd.s32 %v526, %v530
  %v537 = vadd.s32 %v529, %v535
  %vm538 = vc.u32 %v536, %v532
  %v539 = vsel %vm538, 1, 0
  %v540 = vadd.s32 %v536, %v532
  %v541 = vadd.s32 %v537, %v539
  %v542 = vadd.s32 %v541, %v531
  %v543 = vadd.s32 %v542, %v533
  %v544 = vand.u32 %v521, 65535
  %v545 = vshrl.u32 %v521, 16
  %v546 = vand.u32 %v516, 65535
  %v547 = vshrl.u32 %v516, 16
  %v548 = vmul.u32 %v544, %v546
  %v549 = vmul.u32 %v544, %v547
  %v550 = vmul.u32 %v545, %v546
  %v551 = vmul.u32 %v545, %v547
  %v552 = vshll.u32 %v549, 16
  %v553 = vshrl.u32 %v549, 16
  %v554 = vshll.u32 %v550, 16
  %v555 = vshrl.u32 %v550, 16
  %vm556 = vc.u32 %v548, %v552
  %v557 = vsel %vm556, 1, 0
  %v558 = vadd.s32 %v548, %v552
  %v559 = vadd.s32 %v551, %v557
  %vm560 = vc.u32 %v558, %v554
  %v561 = vsel %vm560, 1, 0
  %v562 = vadd.s32 %v558, %v554
  %v563 = vadd.s32 %v559, %v561
  %v564 = vadd.s32 %v563, %v553
  %v565 = vadd.s32 %v564, %v555
  %v566 = vmul.u32 %v521, %v512
  %v567 = vadd.s32 %v543, %v562
  %vm568 = vc.u32 %v543, %v562
  %v569 = vadd.s32 %v565, 1
  %v570 = vsel %vm568, %v569, %v565
  %v571 = vadd.s32 %v566, %v570
  %v572 = vadd.s32 %v571, 536870912
  %v573 = vshrl.u32 %v572, 30
  %v574 = vshll.u32 %v573, 30
  %v575 = vsub.s32 %v571, %v574
  %vm576 = vcmp.lt.s32.totalorder %v575, 0
  %v577 = vsub.s32 0, %v575
  %v578 = vsel %vm576, %v577, %v575
  %v579 = vclz %v578
  %v580 = vsub.s32 %v579, 2
  %vm581 = vcmp.gt.s32.totalorder 0, %v580
  %v582 = vsel %vm581, 0, %v580
  %v583 = vsub.s32 32, %v582
  %v584 = vshll.u32 %v575, %v582
  %v585 = vshrl.u32 %v567, %v583
  %v586 = vor.u32 %v584, %v585
  %v587 = vsub.s32 4294967266, %v582
  %v588 = vadd.s32 %v587, 127
  %v589 = vshll.u32 %v588, 23
  %v590 = vor.u32 4788187, %v589
  %v591 = vand.u32 2147483647, %v590
  %v593 = vcvt.s32.f32 %v586
  %v594 = vmul.f32 %v593, %v591
  %v595 = vxor.u32 %v594, 2147483648
  %v596 = vsel %vm475, %v595, %v594
  %v597 = vsub.s32 4, %v573
  %v598 = vsel %vm475, %v597, %v573
  %v599 = vsel %vm474, %v318, %v596
  %v600 = vsel %vm474, 0, %v598
  %v601 = vmul.f32 %v599, %v599
  %v602 = vmul.f32 %v601, -0.001358992
  %v603 = vadd.f32 %v602, 0.041655596
  %v604 = vmul.f32 %v601, %v603
  %v605 = vadd.f32 %v604, -0.4999988
  %v606 = vmul.f32 %v601, %v605
  %v607 = vadd.f32 1.0, %v606
  %v608 = vmul.f32 %v599, %v599
  %v609 = vmul.f32 %v608, -0.00019511016
  %v610 = vadd.f32 %v609, 0.008332121
  %v611 = vmul.f32 %v608, %v610
  %v612 = vadd.f32 %v611, -0.16666654
  %v613 = vmul.f32 %v608, %v612
  %v614 = vadd.f32 %v613, 1.0
  %v615 = vmul.f32 %v614, %v599
  %vm616 = vweird.f32 %v318
  %v617 = vand.u32 %v600, 3
  %vm618 = vcmp.lt.s32.totalorder %v617, 2
  %vm619 = vcmp.eq.s32.totalorder %v617, 0
  %v620 = vxor.u32 %v615, 2147483648
  %v621 = vsel %vm619, %v607, %v620
  %vm622 = vcmp.eq.s32.totalorder %v617, 2
  %v623 = vxor.u32 %v607, 2147483648
  %v624 = vsel %vm622, %v623, %v615
  %v625 = vsel %vm618, %v621, %v624
  %v626 = vsel %vm616, nan, %v625
  %v627 = vmul.f32 %v304, %v472
  %v628 = vmul.f32 %v316, %v626
  %v629 = vand.u32 2147483647, %v317
  %vm630 = vcmp.le.f32.partialorder %v629, 0.7853982
  %vm631 = vcmp.lt.s32.totalorder %v317, 0
  %v632 = vand.u32 %v317, 2139095040
  %v633 = vshrl.u32 %v632, 23
  %v634 = vsub.s32 %v633, 127
  %v635 = vand.u32 2147483647, %v317
  %v636 = vand.u32 %v635, 8388607
  %v637 = vor.u32 %v636, 8388608
  %v638 = vsub.s32 0, %v637
  %v639 = vadd.s32 %v634, 1
  %vm640 = vcmp.gt.s32.totalorder %v639, 0
  %v641 = vsel %vm640, %v639, 0
  %v642 = vshrl.u32 %v641, 5
  %v643 = vand.u32 %v641, 31
  %v644 = vsub.s32 32, %v643
  %v645 = vshrl.u32 683565275, %v644
  %v646 = vshll.u32 683565275, %v643
  %v647 = vshrl.u32 2475754826, %v644
  %v648 = vor.u32 %v646, %v647
  %v649 = vshll.u32 2475754826, %v643
  %v650 = vshrl.u32 2131351028, %v644
  %v651 = vor.u32 %v649, %v650
  %v652 = vshll.u32 2131351028, %v643
  %v653 = vshrl.u32 2102212464, %v644
  %v654 = vor.u32 %v652, %v653
  %v655 = vshll.u32 2102212464, %v643
  %v656 = vshrl.u32 920167782, %v644
  %v657 = vor.u32 %v655, %v656
  %v658 = vshll.u32 920167782, %v643
  %v659 = vshrl.u32 1326507024, %v644
  %v660 = vor.u32 %v658, %v659
  %vm661 = vcmp.lt.s32.totalorder %v642, 1
  %vm662 = vcmp.lt.s32.totalorder %v642, 2
  %vm663 = vcmp.lt.s32.totalorder %v642, 3
  %vm664 = vcmp.lt.s32.totalorder %v642, 4
  %v665 = vsel %vm661, %v645, %v648
  %v666 = vsel %vm664, %v654, 2102212464
  %v667 = vsel %vm663, %v651, %v666
  %v668 = vsel %vm662, %v665, %v667
  %v669 = vsel %vm661, %v648, %v651
  %v670 = vsel %vm664, %v657, 920167782
  %v671 = vsel %vm663, %v654, %v670
  %v672 = vsel %vm662, %v669, %v671
  %v673 = vsel %vm661, %v651, %v654
  %v674 = vsel %vm664, %v660, 1326507024
  %v675 = vsel %vm663, %v657, %v674
  %v676 = vsel %vm662, %v673, %v675
  %v677 = vshll.u32 %v637, 8
  %v678 = vand.u32 %v677, 65535
  %v679 = vshrl.u32 %v677, 16
  %v680 = vand.u32 %v676, 65535
  %v681 = vshrl.u32 %v676, 16
  %v682 = vmul.u32 %v678, %v680
  %v683 = vmul.u32 %v678, %v681
  %v684 = vmul.u32 %v679, %v680
  %v685 = vmul.u32 %v679, %v681
  %v686 = vshll.u32 %v683, 16
  %v687 = vshrl.u32 %v683, 16
  %v688 = vshll.u32 %v684, 16
  %v689 = vshrl.u32 %v684, 16
  %vm690 = vc.u32 %v682, %v686
  %v691 = vsel %vm690, 1, 0
  %v692 = vadd.s32 %v682, %v686
  %v693 = vadd.s32 %v685, %v691
  %vm694 = vc.u32 %v692, %v688
  %v695 = vsel %vm694, 1, 0
  %v696 = vadd.s32 %v692, %v688
  %v697 = vadd.s32 %v693, %v695
  %v698 = vadd.s32 %v697, %v687
  %v699 = vadd.s32 %v698, %v689
  %v700 = vand.u32 %v677, 65535
  %v701 = vshrl.u32 %v677, 16
  %v702 = vand.u32 %v672, 65535
  %v703 = vshrl.u32 %v672, 16
  %v704 = vmul.u32 %v700, %v702
  %v705 = vmul.u32 %v700, %v703
  %v706 = vmul.u32 %v701, %v702
  %v707 = vmul.u32 %v701, %v703
  %v708 = vshll.u32 %v705, 16
  %v709 = vshrl.u32 %v705, 16
  %v710 = vshll.u32 %v706, 16
  %v711 = vshrl.u32 %v706, 16
  %vm712 = vc.u32 %v704, %v708
  %v713 = vsel %vm712, 1, 0
  %v714 = vadd.s32 %v704, %v708
  %v715 = vadd.s32 %v707, %v713
  %vm716 = vc.u32 %v714, %v710
  %v717 = vsel %vm716, 1, 0
  %v718 = vadd.s32 %v714, %v710
  %v719 = vadd.s32 %v715, %v717
  %v720 = vadd.s32 %v719, %v709
  %v721 = vadd.s32 %v720, %v711
  %v722 = vmul.u32 %v677, %v668
  %v723 = vadd.s32 %v699, %v718
  %vm724 = vc.u32 %v699, %v718
  %v725 = vadd.s32 %v721, 1
  %v726 = vsel %vm724, %v725, %v721
  %v727 = vadd.s32 %v722, %v726
  %v728 = vadd.s32 %v727, 536870912
  %v729 = vshrl.u32 %v728, 30
  %v730 = vshll.u32 %v729, 30
  %v731 = vsub.s32 %v727, %v730
  %vm732 = vcmp.lt.s32.totalorder %v731, 0
  %v733 = vsub.s32 0, %v731
  %v734 = vsel %vm732, %v733, %v731
  %v735 = vclz %v734
  %v736 = vsub.s32 %v735, 2
  %vm737 = vcmp.gt.s32.totalorder 0, %v736
  %v738 = vsel %vm737, 0, %v736
  %v739 = vsub.s32 32, %v738
  %v740 = vshll.u32 %v731, %v738
  %v741 = vshrl.u32 %v723, %v739
  %v742 = vor.u32 %v740, %v741
  %v743 = vsub.s32 4294967266, %v738
  %v744 = vadd.s32 %v743, 127
  %v745 = vshll.u32 %v744, 23
  %v746 = vor.u32 4788187, %v745
  %v747 = vand.u32 2147483647, %v746
  %v749 = vcvt.s32.f32 %v742
  %v750 = vmul.f32 %v749, %v747
  %v751 = vxor.u32 %v750, 2147483648
  %v752 = vsel %vm631, %v751, %v750
  %v753 = vsub.s32 4, %v729
  %v754 = vsel %vm631, %v753, %v729
  %v755 = vsel %vm630, %v317, %v752
  %v756 = vsel %vm630, 0, %v754
  %v757 = vmul.f32 %v755, %v755
  %v758 = vmul.f32 %v757, -0.001358992
  %v759 = vadd.f32 %v758, 0.041655596
  %v760 = vmul.f32 %v757, %v759
  %v761 = vadd.f32 %v760, -0.4999988
  %v762 = vmul.f32 %v757, %v761
  %v763 = vadd.f32 1.0, %v762
  %v764 = vmul.f32 %v755, %v755
  %v765 = vmul.f32 %v764, -0.00019511016
  %v766 = vadd.f32 %v765, 0.008332121
  %v767 = vmul.f32 %v764, %v766
  %v768 = vadd.f32 %v767, -0.16666654
  %v769 = vmul.f32 %v764, %v768
  %v770 = vadd.f32 %v769, 1.0
  %v771 = vmul.f32 %v770, %v755
  %vm772 = vweird.f32 %v317
  %v773 = vadd.s32 %v756, 3
  %v774 = vand.u32 %v773, 3
  %vm775 = vcmp.lt.s32.totalorder %v774, 2
  %vm776 = vcmp.eq.s32.totalorder %v774, 0
  %v777 = vxor.u32 %v771, 2147483648
  %v778 = vsel %vm776, %v763, %v777
  %vm779 = vcmp.eq.s32.totalorder %v774, 2
  %v780 = vxor.u32 %v763, 2147483648
  %v781 = vsel %vm779, %v780, %v771
  %v782 = vsel %vm775, %v778, %v781
  %v783 = vsel %vm772, nan, %v782
  %v784 = vand.u32 2147483647, %v318
  %vm785 = vcmp.le.f32.partialorder %v784, 0.7853982
  %vm786 = vcmp.lt.s32.totalorder %v318, 0
  %v787 = vand.u32 %v318, 2139095040
  %v788 = vshrl.u32 %v787, 23
  %v789 = vsub.s32 %v788, 127
  %v790 = vand.u32 2147483647, %v318
  %v791 = vand.u32 %v790, 8388607
  %v792 = vor.u32 %v791, 8388608
  %v793 = vsub.s32 0, %v792
  %v794 = vadd.s32 %v789, 1
  %vm795 = vcmp.gt.s32.totalorder %v794, 0
  %v796 = vsel %vm795, %v794, 0
  %v797 = vshrl.u32 %v796, 5
  %v798 = vand.u32 %v796, 31
  %v799 = vsub.s32 32, %v798
  %v800 = vshrl.u32 683565275, %v799
  %v801 = vshll.u32 683565275, %v798
  %v802 = vshrl.u32 2475754826, %v799
  %v803 = vor.u32 %v801, %v802
  %v804 = vshll.u32 2475754826, %v798
  %v805 = vshrl.u32 2131351028, %v799
  %v806 = vor.u32 %v804, %v805
  %v807 = vshll.u32 2131351028, %v798
  %v808 = vshrl.u32 2102212464, %v799
  %v809 = vor.u32 %v807, %v808
  %v810 = vshll.u32 2102212464, %v798
  %v811 = vshrl.u32 920167782, %v799
  %v812 = vor.u32 %v810, %v811
  %v813 = vshll.u32 920167782, %v798
  %v814 = vshrl.u32 1326507024, %v799
  %v815 = vor.u32 %v813, %v814
  %vm816 = vcmp.lt.s32.totalorder %v797, 1
  %vm817 = vcmp.lt.s32.totalorder %v797, 2
  %vm818 = vcmp.lt.s32.totalorder %v797, 3
  %vm819 = vcmp.lt.s32.totalorder %v797, 4
  %v820 = vsel %vm816, %v800, %v803
  %v821 = vsel %vm819, %v809, 2102212464
  %v822 = vsel %vm818, %v806, %v821
  %v823 = vsel %vm817, %v820, %v822
  %v824 = vsel %vm816, %v803, %v806
  %v825 = vsel %vm819, %v812, 920167782
  %v826 = vsel %vm818, %v809, %v825
  %v827 = vsel %vm817, %v824, %v826
  %v828 = vsel %vm816, %v806, %v809
  %v829 = vsel %vm819, %v815, 1326507024
  %v830 = vsel %vm818, %v812, %v829
  %v831 = vsel %vm817, %v828, %v830
  %v832 = vshll.u32 %v792, 8
  %v833 = vand.u32 %v832, 65535
  %v834 = vshrl.u32 %v832, 16
  %v835 = vand.u32 %v831, 65535
  %v836 = vshrl.u32 %v831, 16
  %v837 = vmul.u32 %v833, %v835
  %v838 = vmul.u32 %v833, %v836
  %v839 = vmul.u32 %v834, %v835
  %v840 = vmul.u32 %v834, %v836
  %v841 = vshll.u32 %v838, 16
  %v842 = vshrl.u32 %v838, 16
  %v843 = vshll.u32 %v839, 16
  %v844 = vshrl.u32 %v839, 16
  %vm845 = vc.u32 %v837, %v841
  %v846 = vsel %vm845, 1, 0
  %v847 = vadd.s32 %v837, %v841
  %v848 = vadd.s32 %v840, %v846
  %vm849 = vc.u32 %v847, %v843
  %v850 = vsel %vm849, 1, 0
  %v851 = vadd.s32 %v847, %v843
  %v852 = vadd.s32 %v848, %v850
  %v853 = vadd.s32 %v852, %v842
  %v854 = vadd.s32 %v853, %v844
  %v855 = vand.u32 %v832, 65535
  %v856 = vshrl.u32 %v832, 16
  %v857 = vand.u32 %v827, 65535
  %v858 = vshrl.u32 %v827, 16
  %v859 = vmul.u32 %v855, %v857
  %v860 = vmul.u32 %v855, %v858
  %v861 = vmul.u32 %v856, %v857
  %v862 = vmul.u32 %v856, %v858
  %v863 = vshll.u32 %v860, 16
  %v864 = vshrl.u32 %v860, 16
  %v865 = vshll.u32 %v861, 16
  %v866 = vshrl.u32 %v861, 16
  %vm867 = vc.u32 %v859, %v863
  %v868 = vsel %vm867, 1, 0
  %v869 = vadd.s32 %v859, %v863
  %v870 = vadd.s32 %v862, %v868
  %vm871 = vc.u32 %v869, %v865
  %v872 = vsel %vm871, 1, 0
  %v873 = vadd.s32 %v869, %v865
  %v874 = vadd.s32 %v870, %v872
  %v875 = vadd.s32 %v874, %v864
  %v876 = vadd.s32 %v875, %v866
  %v877 = vmul.u32 %v832, %v823
  %v878 = vadd.s32 %v854, %v873
  %vm879 = vc.u32 %v854, %v873
  %v880 = vadd.s32 %v876, 1
  %v881 = vsel %vm879, %v880, %v876
  %v882 = vadd.s32 %v877, %v881
  %v883 = vadd.s32 %v882, 536870912
  %v884 = vshrl.u32 %v883, 30
  %v885 = vshll.u32 %v884, 30
  %v886 = vsub.s32 %v882, %v885
  %vm887 = vcmp.lt.s32.totalorder %v886, 0
  %v888 = vsub.s32 0, %v886
  %v889 = vsel %vm887, %v888, %v886
  %v890 = vclz %v889
  %v891 = vsub.s32 %v890, 2
  %vm892 = vcmp.gt.s32.totalorder 0, %v891
  %v893 = vsel %vm892, 0, %v891
  %v894 = vsub.s32 32, %v893
  %v895 = vshll.u32 %v886, %v893
  %v896 = vshrl.u32 %v878, %v894
  %v897 = vor.u32 %v895, %v896
  %v898 = vsub.s32 4294967266, %v893
  %v899 = vadd.s32 %v898, 127
  %v900 = vshll.u32 %v899, 23
  %v901 = vor.u32 4788187, %v900
  %v902 = vand.u32 2147483647, %v901
  %v904 = vcvt.s32.f32 %v897
  %v905 = vmul.f32 %v904, %v902
  %v906 = vxor.u32 %v905, 2147483648
  %v907 = vsel %vm786, %v906, %v905
  %v908 = vsub.s32 4, %v884
  %v909 = vsel %vm786, %v908, %v884
  %v910 = vsel %vm785, %v318, %v907
  %v911 = vsel %vm785, 0, %v909
  %v912 = vmul.f32 %v910, %v910
  %v913 = vmul.f32 %v912, -0.001358992
  %v914 = vadd.f32 %v913, 0.041655596
  %v915 = vmul.f32 %v912, %v914
  %v916 = vadd.f32 %v915, -0.4999988
  %v917 = vmul.f32 %v912, %v916
  %v918 = vadd.f32 1.0, %v917
  %v919 = vmul.f32 %v910, %v910
  %v920 = vmul.f32 %v919, -0.00019511016
  %v921 = vadd.f32 %v920, 0.008332121
  %v922 = vmul.f32 %v919, %v921
  %v923 = vadd.f32 %v922, -0.16666654
  %v924 = vmul.f32 %v919, %v923
  %v925 = vadd.f32 %v924, 1.0
  %v926 = vmul.f32 %v925, %v910
  %vm927 = vweird.f32 %v318
  %v928 = vadd.s32 %v911, 3
  %v929 = vand.u32 %v928, 3
  %vm930 = vcmp.lt.s32.totalorder %v929, 2
  %vm931 = vcmp.eq.s32.totalorder %v929, 0
  %v932 = vxor.u32 %v926, 2147483648
  %v933 = vsel %vm931, %v918, %v932
  %vm934 = vcmp.eq.s32.totalorder %v929, 2
  %v935 = vxor.u32 %v918, 2147483648
  %v936 = vsel %vm934, %v935, %v926
  %v937 = vsel %vm930, %v933, %v936
  %v938 = vsel %vm927, nan, %v937
  %v939 = vmul.f32 %v304, %v783
  %v940 = vmul.f32 %v316, %v938
  %v941 = vstv %s20
  %v942 = vmul.f32 %v627, %v941
  %v943 = vmul.f32 %v628, %v941
  %v944 = vmul.f32 %v939, %v941
  %v945 = vmul.f32 %v940, %v941
  %v946 = vadd.f32 %v16, %v942
  %v947 = vadd.f32 %v17, %v943
  %v948 = vadd.f32 %v18, %v944
  %v949 = vadd.f32 %v19, %v945
  %950 = vst [vmem:[%s3] sm:$0xff] %v946
  %951 = vst [vmem:[%s3 + $0x8] sm:$0xff] %v947
  %952 = vst [vmem:[%s3 + $0x10] sm:$0xff] %v948
  %953 = vst [vmem:[%s3 + $0x18] sm:$0xff] %v949
  // Predicated region
  $region14: #{gaussian_noise.3} parent=0 // pred_check
    _
  $region15: #{gaussian_noise.3} parent=0 // pred_check_branch
    %955 = sbr.rel (0) target = $region17
  $region16: #{gaussian_noise.3} parent=0 // pred_region
    _
  $region17: #{gaussian_noise.3} parent=0 // pred_fallthru
    _
  // Predicated region
  $region18: #{gaussian_noise.3} parent=0 // pred_check
    _
  $region19: #{gaussian_noise.3} parent=0 // pred_check_branch
    %957 = sbr.rel (0) target = $region21
  $region20: #{gaussian_noise.3} parent=0 // pred_region
    _
  $region21: #{gaussian_noise.3} parent=0 // pred_fallthru
    _

</llo_original>
